<compile_context>
chip_gen: v6e
topology: v6e:2x2x1
jax: 0.10.0
libtpu: 0.0.40
codegen_flags: <defaults>
</compile_context>

<pallas_src>
import jax
import jax.numpy as jnp
from jax.experimental import pallas as pl
from jax.experimental.pallas import tpu as pltpu


def _round_up(x, m):
    return ((x + m - 1) // m) * m


def ffnet_kernel(idx_ref, emb_hbm, w_ref, b_ref, out_ref, x_vmem, sem):
    """Fused embedding-gather (DMA) + linear + log_softmax kernel.

    idx_ref : (B_pad,) int32 word indices          (SMEM, scalar prefetch)
    emb_hbm : (V, E_pad) float32 embedding table   (HBM, manual DMA)
    w_ref   : (E_pad, N_pad) float32 weight (W^T)  (VMEM)
    b_ref   : (1, N_pad) float32 bias (pad=-1e30)  (VMEM)
    out_ref : (TILE_B, N_pad) float32 log-probs    (VMEM)
    x_vmem  : (TILE_B, E_pad) float32 scratch      (VMEM)
    sem     : (TILE_B,) DMA semaphores
    """
    i = pl.program_id(0)
    tile_b = x_vmem.shape[0]

    # Gather tile_b embedding rows HBM -> VMEM, one async row copy each,
    # with addressing driven from SMEM-resident indices on the scalar unit.
    for r in range(tile_b):
        word = idx_ref[i * tile_b + r]
        pltpu.make_async_copy(
            emb_hbm.at[pl.ds(word, 1), :], x_vmem.at[pl.ds(r, 1), :], sem.at[r]
        ).start()
    for r in range(tile_b):
        pltpu.make_async_copy(
            emb_hbm.at[pl.ds(0, 1), :], x_vmem.at[pl.ds(r, 1), :], sem.at[r]
        ).wait()

    # Linear: x @ W^T (weight pre-transposed wrapper-side) + b.
    logits = jnp.dot(x_vmem[...], w_ref[...],
                     preferred_element_type=jnp.float32) + b_ref[...]

    # LogSoftmax along the class axis. Padded class columns have bias -1e30,
    # so exp(shifted) underflows to 0 there and the real columns are exact.
    m = jnp.max(logits, axis=-1, keepdims=True)
    shifted = logits - m
    lse = jnp.log(jnp.sum(jnp.exp(shifted), axis=-1, keepdims=True))
    out_ref[...] = shifted - lse


def ffnet_forward(text, emb_table, w, b, *, tile_b=8):
    """text: (B,) int indices -> (B, num_y) log-probabilities."""
    B = text.shape[0]
    V, E = emb_table.shape
    num_y = w.shape[0]

    E_pad = _round_up(E, 128)
    N_pad = _round_up(num_y, 128)
    B_pad = _round_up(B, tile_b)

    # Clamp indices (PyTorch nn.Embedding would raise on OOB; DMA gather has
    # no runtime bounds check, so never let a bad index reach the kernel).
    idx = jnp.clip(text.astype(jnp.int32), 0, V - 1)
    idx = jnp.pad(idx, (0, B_pad - B))

    # Pad E with zero columns (exact no-op for the dot product).
    emb_p = jnp.zeros((V, E_pad), jnp.float32).at[:, :E].set(
        emb_table.astype(jnp.float32))
    # Pre-transposed weight (E_pad, N_pad); padded rows/cols are zero.
    w_p = jnp.zeros((E_pad, N_pad), jnp.float32).at[:E, :num_y].set(
        w.astype(jnp.float32).T)
    # Padded class columns get a large negative bias -> vanish in log_softmax.
    b_p = jnp.full((1, N_pad), -1e30, jnp.float32).at[0, :num_y].set(
        b.astype(jnp.float32))

    out = pl.pallas_call(
        ffnet_kernel,
        out_shape=jax.ShapeDtypeStruct((B_pad, N_pad), jnp.float32),
        grid_spec=pltpu.PrefetchScalarGridSpec(
            num_scalar_prefetch=1,
            grid=(B_pad // tile_b,),
            in_specs=[
                pl.BlockSpec(memory_space=pl.ANY),                     # table in HBM
                pl.BlockSpec((E_pad, N_pad), lambda i, idx: (0, 0)),   # W^T (resident)
                pl.BlockSpec((1, N_pad), lambda i, idx: (0, 0)),       # bias (resident)
            ],
            out_specs=pl.BlockSpec((tile_b, N_pad), lambda i, idx: (i, 0)),
            scratch_shapes=[
                pltpu.VMEM((tile_b, E_pad), jnp.float32),
                pltpu.SemaphoreType.DMA((tile_b,)),
            ],
        ),
        compiler_params=pltpu.CompilerParams(
            dimension_semantics=("parallel",),
            vmem_limit_bytes=64 * 1024 * 1024,
        ),
    )(idx, emb_p, w_p, b_p)

    return out[:B, :num_y]


def ffnet_reference(text, emb_table, w, b):
    embeds = jnp.take(emb_table, text, axis=0)
    logits = embeds @ w.T + b
    return jax.nn.log_softmax(logits, axis=1)


if __name__ == "__main__":
    # Small, deterministic problem consistent with the module's __init__.
    num_words = 50
    emb_dim = 10
    num_y = 5
    batch = 10  # not a multiple of tile_b -> exercises batch padding path

    key = jax.random.PRNGKey(0)
    k_idx, k_emb, k_w, k_b = jax.random.split(key, 4)

    # Deterministic synthetic parameters (mirroring PyTorch default inits):
    # nn.Embedding ~ N(0, 1); nn.Linear ~ U(-1/sqrt(in), 1/sqrt(in)).
    emb_table = jax.random.normal(k_emb, (num_words, emb_dim), dtype=jnp.float32)
    bound = 1.0 / jnp.sqrt(jnp.float32(emb_dim))
    w = jax.random.uniform(k_w, (num_y, emb_dim), dtype=jnp.float32,
                           minval=-bound, maxval=bound)
    b = jax.random.uniform(k_b, (num_y,), dtype=jnp.float32,
                           minval=-bound, maxval=bound)

    text = jax.random.randint(k_idx, (batch,), 0, num_words, dtype=jnp.int32)

    out = ffnet_forward(text, emb_table, w, b)
    out = jax.block_until_ready(out)

    ref = ffnet_reference(text, emb_table, w, b)
    assert out.shape == (batch, num_y)
    assert jnp.allclose(out, ref, atol=1e-5, rtol=1e-5)

    print("KERNEL_OK")
</pallas_src>

<mosaic_0001>
module attributes {stable_mosaic.version = 11 : i64} {
  func.func @ffnet_kernel(%arg0: i32, %arg1: memref<16xi32, #tpu.memory_space<smem>>, %arg2: memref<50x128xf32, #tpu.memory_space<any>>, %arg3: memref<128x128xf32, #tpu.memory_space<vmem>>, %arg4: memref<1x128xf32, #tpu.memory_space<vmem>>, %arg5: memref<8x128xf32, #tpu.memory_space<vmem>>, %arg6: memref<8x128xf32, #tpu.memory_space<vmem>>, %arg7: memref<8x!tpu.dma_semaphore, #tpu.memory_space<semaphore_mem>>) attributes {dimension_semantics = [#tpu.dimension_semantics<parallel>], iteration_bounds = array<i64: 2>, scalar_prefetch = 1 : i64, scratch_operands = 2 : i64, tpu.core_type = #tpu.core_type<tc>, window_params = [{}, {pipeline_mode = #tpu.pipeline_mode<synchronous>, transform_indices = @transform_1, window_bounds = array<i64: 128, 128>}, {pipeline_mode = #tpu.pipeline_mode<synchronous>, transform_indices = @transform_2, window_bounds = array<i64: 1, 128>}, {transform_indices = @transform_3, window_bounds = array<i64: 8, 128>}]} {
    %c8_i32 = arith.constant 8 : i32
    %0 = arith.muli %arg0, %c8_i32 : i32
    %c0_i32 = arith.constant 0 : i32
    %1 = arith.addi %0, %c0_i32 : i32
    %2 = arith.index_cast %1 : i32 to index
    %3 = memref.load %arg1[%2] : memref<16xi32, #tpu.memory_space<smem>>
    %c0_i32_0 = arith.constant 0 : i32
    %c0_i32_1 = arith.constant 0 : i32
    %4 = tpu.memref_slice %arg2[%3, %c0_i32_1] : memref<50x128xf32, #tpu.memory_space<any>> -> memref<1x128xf32, #tpu.memory_space<any>>
    %c0_i32_2 = arith.constant 0 : i32
    %c0_i32_3 = arith.constant 0 : i32
    %5 = tpu.memref_slice %arg6[%c0_i32_2, %c0_i32_3] : memref<8x128xf32, #tpu.memory_space<vmem>> -> memref<1x128xf32, #tpu.memory_space<vmem>>
    %6 = tpu.memref_slice %arg7[%c0_i32_0] : memref<8x!tpu.dma_semaphore, #tpu.memory_space<semaphore_mem>> -> memref<1x!tpu.dma_semaphore, #tpu.memory_space<semaphore_mem>>
    %7 = tpu.memref_squeeze %6 : memref<1x!tpu.dma_semaphore, #tpu.memory_space<semaphore_mem>> -> memref<!tpu.dma_semaphore, #tpu.memory_space<semaphore_mem>>
    tpu.enqueue_dma source(%4 : memref<1x128xf32, #tpu.memory_space<any>>) target(%5 : memref<1x128xf32, #tpu.memory_space<vmem>>) target_semaphore(%7 : memref<!tpu.dma_semaphore, #tpu.memory_space<semaphore_mem>>)
    %c8_i32_4 = arith.constant 8 : i32
    %8 = arith.muli %arg0, %c8_i32_4 : i32
    %c1_i32 = arith.constant 1 : i32
    %9 = arith.addi %8, %c1_i32 : i32
    %10 = arith.index_cast %9 : i32 to index
    %11 = memref.load %arg1[%10] : memref<16xi32, #tpu.memory_space<smem>>
    %c1_i32_5 = arith.constant 1 : i32
    %c0_i32_6 = arith.constant 0 : i32
    %12 = tpu.memref_slice %arg2[%11, %c0_i32_6] : memref<50x128xf32, #tpu.memory_space<any>> -> memref<1x128xf32, #tpu.memory_space<any>>
    %c1_i32_7 = arith.constant 1 : i32
    %c0_i32_8 = arith.constant 0 : i32
    %13 = tpu.memref_slice %arg6[%c1_i32_7, %c0_i32_8] : memref<8x128xf32, #tpu.memory_space<vmem>> -> memref<1x128xf32, #tpu.memory_space<vmem>>
    %14 = tpu.memref_slice %arg7[%c1_i32_5] : memref<8x!tpu.dma_semaphore, #tpu.memory_space<semaphore_mem>> -> memref<1x!tpu.dma_semaphore, #tpu.memory_space<semaphore_mem>>
    %15 = tpu.memref_squeeze %14 : memref<1x!tpu.dma_semaphore, #tpu.memory_space<semaphore_mem>> -> memref<!tpu.dma_semaphore, #tpu.memory_space<semaphore_mem>>
    tpu.enqueue_dma source(%12 : memref<1x128xf32, #tpu.memory_space<any>>) target(%13 : memref<1x128xf32, #tpu.memory_space<vmem>>) target_semaphore(%15 : memref<!tpu.dma_semaphore, #tpu.memory_space<semaphore_mem>>)
    %c8_i32_9 = arith.constant 8 : i32
    %16 = arith.muli %arg0, %c8_i32_9 : i32
    %c2_i32 = arith.constant 2 : i32
    %17 = arith.addi %16, %c2_i32 : i32
    %18 = arith.index_cast %17 : i32 to index
    %19 = memref.load %arg1[%18] : memref<16xi32, #tpu.memory_space<smem>>
    %c2_i32_10 = arith.constant 2 : i32
    %c0_i32_11 = arith.constant 0 : i32
    %20 = tpu.memref_slice %arg2[%19, %c0_i32_11] : memref<50x128xf32, #tpu.memory_space<any>> -> memref<1x128xf32, #tpu.memory_space<any>>
    %c2_i32_12 = arith.constant 2 : i32
    %c0_i32_13 = arith.constant 0 : i32
    %21 = tpu.memref_slice %arg6[%c2_i32_12, %c0_i32_13] : memref<8x128xf32, #tpu.memory_space<vmem>> -> memref<1x128xf32, #tpu.memory_space<vmem>>
    %22 = tpu.memref_slice %arg7[%c2_i32_10] : memref<8x!tpu.dma_semaphore, #tpu.memory_space<semaphore_mem>> -> memref<1x!tpu.dma_semaphore, #tpu.memory_space<semaphore_mem>>
    %23 = tpu.memref_squeeze %22 : memref<1x!tpu.dma_semaphore, #tpu.memory_space<semaphore_mem>> -> memref<!tpu.dma_semaphore, #tpu.memory_space<semaphore_mem>>
    tpu.enqueue_dma source(%20 : memref<1x128xf32, #tpu.memory_space<any>>) target(%21 : memref<1x128xf32, #tpu.memory_space<vmem>>) target_semaphore(%23 : memref<!tpu.dma_semaphore, #tpu.memory_space<semaphore_mem>>)
    %c8_i32_14 = arith.constant 8 : i32
    %24 = arith.muli %arg0, %c8_i32_14 : i32
    %c3_i32 = arith.constant 3 : i32
    %25 = arith.addi %24, %c3_i32 : i32
    %26 = arith.index_cast %25 : i32 to index
    %27 = memref.load %arg1[%26] : memref<16xi32, #tpu.memory_space<smem>>
    %c3_i32_15 = arith.constant 3 : i32
    %c0_i32_16 = arith.constant 0 : i32
    %28 = tpu.memref_slice %arg2[%27, %c0_i32_16] : memref<50x128xf32, #tpu.memory_space<any>> -> memref<1x128xf32, #tpu.memory_space<any>>
    %c3_i32_17 = arith.constant 3 : i32
    %c0_i32_18 = arith.constant 0 : i32
    %29 = tpu.memref_slice %arg6[%c3_i32_17, %c0_i32_18] : memref<8x128xf32, #tpu.memory_space<vmem>> -> memref<1x128xf32, #tpu.memory_space<vmem>>
    %30 = tpu.memref_slice %arg7[%c3_i32_15] : memref<8x!tpu.dma_semaphore, #tpu.memory_space<semaphore_mem>> -> memref<1x!tpu.dma_semaphore, #tpu.memory_space<semaphore_mem>>
    %31 = tpu.memref_squeeze %30 : memref<1x!tpu.dma_semaphore, #tpu.memory_space<semaphore_mem>> -> memref<!tpu.dma_semaphore, #tpu.memory_space<semaphore_mem>>
    tpu.enqueue_dma source(%28 : memref<1x128xf32, #tpu.memory_space<any>>) target(%29 : memref<1x128xf32, #tpu.memory_space<vmem>>) target_semaphore(%31 : memref<!tpu.dma_semaphore, #tpu.memory_space<semaphore_mem>>)
    %c8_i32_19 = arith.constant 8 : i32
    %32 = arith.muli %arg0, %c8_i32_19 : i32
    %c4_i32 = arith.constant 4 : i32
    %33 = arith.addi %32, %c4_i32 : i32
    %34 = arith.index_cast %33 : i32 to index
    %35 = memref.load %arg1[%34] : memref<16xi32, #tpu.memory_space<smem>>
    %c4_i32_20 = arith.constant 4 : i32
    %c0_i32_21 = arith.constant 0 : i32
    %36 = tpu.memref_slice %arg2[%35, %c0_i32_21] : memref<50x128xf32, #tpu.memory_space<any>> -> memref<1x128xf32, #tpu.memory_space<any>>
    %c4_i32_22 = arith.constant 4 : i32
    %c0_i32_23 = arith.constant 0 : i32
    %37 = tpu.memref_slice %arg6[%c4_i32_22, %c0_i32_23] : memref<8x128xf32, #tpu.memory_space<vmem>> -> memref<1x128xf32, #tpu.memory_space<vmem>>
    %38 = tpu.memref_slice %arg7[%c4_i32_20] : memref<8x!tpu.dma_semaphore, #tpu.memory_space<semaphore_mem>> -> memref<1x!tpu.dma_semaphore, #tpu.memory_space<semaphore_mem>>
    %39 = tpu.memref_squeeze %38 : memref<1x!tpu.dma_semaphore, #tpu.memory_space<semaphore_mem>> -> memref<!tpu.dma_semaphore, #tpu.memory_space<semaphore_mem>>
    tpu.enqueue_dma source(%36 : memref<1x128xf32, #tpu.memory_space<any>>) target(%37 : memref<1x128xf32, #tpu.memory_space<vmem>>) target_semaphore(%39 : memref<!tpu.dma_semaphore, #tpu.memory_space<semaphore_mem>>)
    %c8_i32_24 = arith.constant 8 : i32
    %40 = arith.muli %arg0, %c8_i32_24 : i32
    %c5_i32 = arith.constant 5 : i32
    %41 = arith.addi %40, %c5_i32 : i32
    %42 = arith.index_cast %41 : i32 to index
    %43 = memref.load %arg1[%42] : memref<16xi32, #tpu.memory_space<smem>>
    %c5_i32_25 = arith.constant 5 : i32
    %c0_i32_26 = arith.constant 0 : i32
    %44 = tpu.memref_slice %arg2[%43, %c0_i32_26] : memref<50x128xf32, #tpu.memory_space<any>> -> memref<1x128xf32, #tpu.memory_space<any>>
    %c5_i32_27 = arith.constant 5 : i32
    %c0_i32_28 = arith.constant 0 : i32
    %45 = tpu.memref_slice %arg6[%c5_i32_27, %c0_i32_28] : memref<8x128xf32, #tpu.memory_space<vmem>> -> memref<1x128xf32, #tpu.memory_space<vmem>>
    %46 = tpu.memref_slice %arg7[%c5_i32_25] : memref<8x!tpu.dma_semaphore, #tpu.memory_space<semaphore_mem>> -> memref<1x!tpu.dma_semaphore, #tpu.memory_space<semaphore_mem>>
    %47 = tpu.memref_squeeze %46 : memref<1x!tpu.dma_semaphore, #tpu.memory_space<semaphore_mem>> -> memref<!tpu.dma_semaphore, #tpu.memory_space<semaphore_mem>>
    tpu.enqueue_dma source(%44 : memref<1x128xf32, #tpu.memory_space<any>>) target(%45 : memref<1x128xf32, #tpu.memory_space<vmem>>) target_semaphore(%47 : memref<!tpu.dma_semaphore, #tpu.memory_space<semaphore_mem>>)
    %c8_i32_29 = arith.constant 8 : i32
    %48 = arith.muli %arg0, %c8_i32_29 : i32
    %c6_i32 = arith.constant 6 : i32
    %49 = arith.addi %48, %c6_i32 : i32
    %50 = arith.index_cast %49 : i32 to index
    %51 = memref.load %arg1[%50] : memref<16xi32, #tpu.memory_space<smem>>
    %c6_i32_30 = arith.constant 6 : i32
    %c0_i32_31 = arith.constant 0 : i32
    %52 = tpu.memref_slice %arg2[%51, %c0_i32_31] : memref<50x128xf32, #tpu.memory_space<any>> -> memref<1x128xf32, #tpu.memory_space<any>>
    %c6_i32_32 = arith.constant 6 : i32
    %c0_i32_33 = arith.constant 0 : i32
    %53 = tpu.memref_slice %arg6[%c6_i32_32, %c0_i32_33] : memref<8x128xf32, #tpu.memory_space<vmem>> -> memref<1x128xf32, #tpu.memory_space<vmem>>
    %54 = tpu.memref_slice %arg7[%c6_i32_30] : memref<8x!tpu.dma_semaphore, #tpu.memory_space<semaphore_mem>> -> memref<1x!tpu.dma_semaphore, #tpu.memory_space<semaphore_mem>>
    %55 = tpu.memref_squeeze %54 : memref<1x!tpu.dma_semaphore, #tpu.memory_space<semaphore_mem>> -> memref<!tpu.dma_semaphore, #tpu.memory_space<semaphore_mem>>
    tpu.enqueue_dma source(%52 : memref<1x128xf32, #tpu.memory_space<any>>) target(%53 : memref<1x128xf32, #tpu.memory_space<vmem>>) target_semaphore(%55 : memref<!tpu.dma_semaphore, #tpu.memory_space<semaphore_mem>>)
    %c8_i32_34 = arith.constant 8 : i32
    %56 = arith.muli %arg0, %c8_i32_34 : i32
    %c7_i32 = arith.constant 7 : i32
    %57 = arith.addi %56, %c7_i32 : i32
    %58 = arith.index_cast %57 : i32 to index
    %59 = memref.load %arg1[%58] : memref<16xi32, #tpu.memory_space<smem>>
    %c7_i32_35 = arith.constant 7 : i32
    %c0_i32_36 = arith.constant 0 : i32
    %60 = tpu.memref_slice %arg2[%59, %c0_i32_36] : memref<50x128xf32, #tpu.memory_space<any>> -> memref<1x128xf32, #tpu.memory_space<any>>
    %c7_i32_37 = arith.constant 7 : i32
    %c0_i32_38 = arith.constant 0 : i32
    %61 = tpu.memref_slice %arg6[%c7_i32_37, %c0_i32_38] : memref<8x128xf32, #tpu.memory_space<vmem>> -> memref<1x128xf32, #tpu.memory_space<vmem>>
    %62 = tpu.memref_slice %arg7[%c7_i32_35] : memref<8x!tpu.dma_semaphore, #tpu.memory_space<semaphore_mem>> -> memref<1x!tpu.dma_semaphore, #tpu.memory_space<semaphore_mem>>
    %63 = tpu.memref_squeeze %62 : memref<1x!tpu.dma_semaphore, #tpu.memory_space<semaphore_mem>> -> memref<!tpu.dma_semaphore, #tpu.memory_space<semaphore_mem>>
    tpu.enqueue_dma source(%60 : memref<1x128xf32, #tpu.memory_space<any>>) target(%61 : memref<1x128xf32, #tpu.memory_space<vmem>>) target_semaphore(%63 : memref<!tpu.dma_semaphore, #tpu.memory_space<semaphore_mem>>)
    %c0_i32_39 = arith.constant 0 : i32
    %c0_i32_40 = arith.constant 0 : i32
    %c0_i32_41 = arith.constant 0 : i32
    %64 = tpu.memref_slice %arg2[%c0_i32_40, %c0_i32_41] : memref<50x128xf32, #tpu.memory_space<any>> -> memref<1x128xf32, #tpu.memory_space<any>>
    %c0_i32_42 = arith.constant 0 : i32
    %c0_i32_43 = arith.constant 0 : i32
    %65 = tpu.memref_slice %arg6[%c0_i32_42, %c0_i32_43] : memref<8x128xf32, #tpu.memory_space<vmem>> -> memref<1x128xf32, #tpu.memory_space<vmem>>
    %66 = tpu.memref_slice %arg7[%c0_i32_39] : memref<8x!tpu.dma_semaphore, #tpu.memory_space<semaphore_mem>> -> memref<1x!tpu.dma_semaphore, #tpu.memory_space<semaphore_mem>>
    %67 = tpu.memref_squeeze %66 : memref<1x!tpu.dma_semaphore, #tpu.memory_space<semaphore_mem>> -> memref<!tpu.dma_semaphore, #tpu.memory_space<semaphore_mem>>
    tpu.wait_dma2 semaphore(%67 : memref<!tpu.dma_semaphore, #tpu.memory_space<semaphore_mem>>) src(%64 : memref<1x128xf32, #tpu.memory_space<any>>) dst(%65 : memref<1x128xf32, #tpu.memory_space<vmem>>)
    %c1_i32_44 = arith.constant 1 : i32
    %c0_i32_45 = arith.constant 0 : i32
    %c0_i32_46 = arith.constant 0 : i32
    %68 = tpu.memref_slice %arg2[%c0_i32_45, %c0_i32_46] : memref<50x128xf32, #tpu.memory_space<any>> -> memref<1x128xf32, #tpu.memory_space<any>>
    %c1_i32_47 = arith.constant 1 : i32
    %c0_i32_48 = arith.constant 0 : i32
    %69 = tpu.memref_slice %arg6[%c1_i32_47, %c0_i32_48] : memref<8x128xf32, #tpu.memory_space<vmem>> -> memref<1x128xf32, #tpu.memory_space<vmem>>
    %70 = tpu.memref_slice %arg7[%c1_i32_44] : memref<8x!tpu.dma_semaphore, #tpu.memory_space<semaphore_mem>> -> memref<1x!tpu.dma_semaphore, #tpu.memory_space<semaphore_mem>>
    %71 = tpu.memref_squeeze %70 : memref<1x!tpu.dma_semaphore, #tpu.memory_space<semaphore_mem>> -> memref<!tpu.dma_semaphore, #tpu.memory_space<semaphore_mem>>
    tpu.wait_dma2 semaphore(%71 : memref<!tpu.dma_semaphore, #tpu.memory_space<semaphore_mem>>) src(%68 : memref<1x128xf32, #tpu.memory_space<any>>) dst(%69 : memref<1x128xf32, #tpu.memory_space<vmem>>)
    %c2_i32_49 = arith.constant 2 : i32
    %c0_i32_50 = arith.constant 0 : i32
    %c0_i32_51 = arith.constant 0 : i32
    %72 = tpu.memref_slice %arg2[%c0_i32_50, %c0_i32_51] : memref<50x128xf32, #tpu.memory_space<any>> -> memref<1x128xf32, #tpu.memory_space<any>>
    %c2_i32_52 = arith.constant 2 : i32
    %c0_i32_53 = arith.constant 0 : i32
    %73 = tpu.memref_slice %arg6[%c2_i32_52, %c0_i32_53] : memref<8x128xf32, #tpu.memory_space<vmem>> -> memref<1x128xf32, #tpu.memory_space<vmem>>
    %74 = tpu.memref_slice %arg7[%c2_i32_49] : memref<8x!tpu.dma_semaphore, #tpu.memory_space<semaphore_mem>> -> memref<1x!tpu.dma_semaphore, #tpu.memory_space<semaphore_mem>>
    %75 = tpu.memref_squeeze %74 : memref<1x!tpu.dma_semaphore, #tpu.memory_space<semaphore_mem>> -> memref<!tpu.dma_semaphore, #tpu.memory_space<semaphore_mem>>
    tpu.wait_dma2 semaphore(%75 : memref<!tpu.dma_semaphore, #tpu.memory_space<semaphore_mem>>) src(%72 : memref<1x128xf32, #tpu.memory_space<any>>) dst(%73 : memref<1x128xf32, #tpu.memory_space<vmem>>)
    %c3_i32_54 = arith.constant 3 : i32
    %c0_i32_55 = arith.constant 0 : i32
    %c0_i32_56 = arith.constant 0 : i32
    %76 = tpu.memref_slice %arg2[%c0_i32_55, %c0_i32_56] : memref<50x128xf32, #tpu.memory_space<any>> -> memref<1x128xf32, #tpu.memory_space<any>>
    %c3_i32_57 = arith.constant 3 : i32
    %c0_i32_58 = arith.constant 0 : i32
    %77 = tpu.memref_slice %arg6[%c3_i32_57, %c0_i32_58] : memref<8x128xf32, #tpu.memory_space<vmem>> -> memref<1x128xf32, #tpu.memory_space<vmem>>
    %78 = tpu.memref_slice %arg7[%c3_i32_54] : memref<8x!tpu.dma_semaphore, #tpu.memory_space<semaphore_mem>> -> memref<1x!tpu.dma_semaphore, #tpu.memory_space<semaphore_mem>>
    %79 = tpu.memref_squeeze %78 : memref<1x!tpu.dma_semaphore, #tpu.memory_space<semaphore_mem>> -> memref<!tpu.dma_semaphore, #tpu.memory_space<semaphore_mem>>
    tpu.wait_dma2 semaphore(%79 : memref<!tpu.dma_semaphore, #tpu.memory_space<semaphore_mem>>) src(%76 : memref<1x128xf32, #tpu.memory_space<any>>) dst(%77 : memref<1x128xf32, #tpu.memory_space<vmem>>)
    %c4_i32_59 = arith.constant 4 : i32
    %c0_i32_60 = arith.constant 0 : i32
    %c0_i32_61 = arith.constant 0 : i32
    %80 = tpu.memref_slice %arg2[%c0_i32_60, %c0_i32_61] : memref<50x128xf32, #tpu.memory_space<any>> -> memref<1x128xf32, #tpu.memory_space<any>>
    %c4_i32_62 = arith.constant 4 : i32
    %c0_i32_63 = arith.constant 0 : i32
    %81 = tpu.memref_slice %arg6[%c4_i32_62, %c0_i32_63] : memref<8x128xf32, #tpu.memory_space<vmem>> -> memref<1x128xf32, #tpu.memory_space<vmem>>
    %82 = tpu.memref_slice %arg7[%c4_i32_59] : memref<8x!tpu.dma_semaphore, #tpu.memory_space<semaphore_mem>> -> memref<1x!tpu.dma_semaphore, #tpu.memory_space<semaphore_mem>>
    %83 = tpu.memref_squeeze %82 : memref<1x!tpu.dma_semaphore, #tpu.memory_space<semaphore_mem>> -> memref<!tpu.dma_semaphore, #tpu.memory_space<semaphore_mem>>
    tpu.wait_dma2 semaphore(%83 : memref<!tpu.dma_semaphore, #tpu.memory_space<semaphore_mem>>) src(%80 : memref<1x128xf32, #tpu.memory_space<any>>) dst(%81 : memref<1x128xf32, #tpu.memory_space<vmem>>)
    %c5_i32_64 = arith.constant 5 : i32
    %c0_i32_65 = arith.constant 0 : i32
    %c0_i32_66 = arith.constant 0 : i32
    %84 = tpu.memref_slice %arg2[%c0_i32_65, %c0_i32_66] : memref<50x128xf32, #tpu.memory_space<any>> -> memref<1x128xf32, #tpu.memory_space<any>>
    %c5_i32_67 = arith.constant 5 : i32
    %c0_i32_68 = arith.constant 0 : i32
    %85 = tpu.memref_slice %arg6[%c5_i32_67, %c0_i32_68] : memref<8x128xf32, #tpu.memory_space<vmem>> -> memref<1x128xf32, #tpu.memory_space<vmem>>
    %86 = tpu.memref_slice %arg7[%c5_i32_64] : memref<8x!tpu.dma_semaphore, #tpu.memory_space<semaphore_mem>> -> memref<1x!tpu.dma_semaphore, #tpu.memory_space<semaphore_mem>>
    %87 = tpu.memref_squeeze %86 : memref<1x!tpu.dma_semaphore, #tpu.memory_space<semaphore_mem>> -> memref<!tpu.dma_semaphore, #tpu.memory_space<semaphore_mem>>
    tpu.wait_dma2 semaphore(%87 : memref<!tpu.dma_semaphore, #tpu.memory_space<semaphore_mem>>) src(%84 : memref<1x128xf32, #tpu.memory_space<any>>) dst(%85 : memref<1x128xf32, #tpu.memory_space<vmem>>)
    %c6_i32_69 = arith.constant 6 : i32
    %c0_i32_70 = arith.constant 0 : i32
    %c0_i32_71 = arith.constant 0 : i32
    %88 = tpu.memref_slice %arg2[%c0_i32_70, %c0_i32_71] : memref<50x128xf32, #tpu.memory_space<any>> -> memref<1x128xf32, #tpu.memory_space<any>>
    %c6_i32_72 = arith.constant 6 : i32
    %c0_i32_73 = arith.constant 0 : i32
    %89 = tpu.memref_slice %arg6[%c6_i32_72, %c0_i32_73] : memref<8x128xf32, #tpu.memory_space<vmem>> -> memref<1x128xf32, #tpu.memory_space<vmem>>
    %90 = tpu.memref_slice %arg7[%c6_i32_69] : memref<8x!tpu.dma_semaphore, #tpu.memory_space<semaphore_mem>> -> memref<1x!tpu.dma_semaphore, #tpu.memory_space<semaphore_mem>>
    %91 = tpu.memref_squeeze %90 : memref<1x!tpu.dma_semaphore, #tpu.memory_space<semaphore_mem>> -> memref<!tpu.dma_semaphore, #tpu.memory_space<semaphore_mem>>
    tpu.wait_dma2 semaphore(%91 : memref<!tpu.dma_semaphore, #tpu.memory_space<semaphore_mem>>) src(%88 : memref<1x128xf32, #tpu.memory_space<any>>) dst(%89 : memref<1x128xf32, #tpu.memory_space<vmem>>)
    %c7_i32_74 = arith.constant 7 : i32
    %c0_i32_75 = arith.constant 0 : i32
    %c0_i32_76 = arith.constant 0 : i32
    %92 = tpu.memref_slice %arg2[%c0_i32_75, %c0_i32_76] : memref<50x128xf32, #tpu.memory_space<any>> -> memref<1x128xf32, #tpu.memory_space<any>>
    %c7_i32_77 = arith.constant 7 : i32
    %c0_i32_78 = arith.constant 0 : i32
    %93 = tpu.memref_slice %arg6[%c7_i32_77, %c0_i32_78] : memref<8x128xf32, #tpu.memory_space<vmem>> -> memref<1x128xf32, #tpu.memory_space<vmem>>
    %94 = tpu.memref_slice %arg7[%c7_i32_74] : memref<8x!tpu.dma_semaphore, #tpu.memory_space<semaphore_mem>> -> memref<1x!tpu.dma_semaphore, #tpu.memory_space<semaphore_mem>>
    %95 = tpu.memref_squeeze %94 : memref<1x!tpu.dma_semaphore, #tpu.memory_space<semaphore_mem>> -> memref<!tpu.dma_semaphore, #tpu.memory_space<semaphore_mem>>
    tpu.wait_dma2 semaphore(%95 : memref<!tpu.dma_semaphore, #tpu.memory_space<semaphore_mem>>) src(%92 : memref<1x128xf32, #tpu.memory_space<any>>) dst(%93 : memref<1x128xf32, #tpu.memory_space<vmem>>)
    %c0 = arith.constant 0 : index
    %c0_79 = arith.constant 0 : index
    %96 = vector.load %arg6[%c0, %c0_79] : memref<8x128xf32, #tpu.memory_space<vmem>>, vector<8x128xf32>
    %c0_80 = arith.constant 0 : index
    %c0_81 = arith.constant 0 : index
    %97 = vector.load %arg3[%c0_80, %c0_81] : memref<128x128xf32, #tpu.memory_space<vmem>>, vector<128x128xf32>
    %cst = arith.constant dense<0.000000e+00> : vector<8x128xf32>
    %98 = tpu.matmul %96, %97, %cst {dimension_numbers = #tpu.dot_dimension_numbers<[1], [0], [0], [1], [0, 0, 1, 1], [], []>} : vector<8x128xf32>, vector<128x128xf32>, vector<8x128xf32> -> vector<8x128xf32>
    %c0_82 = arith.constant 0 : index
    %c0_83 = arith.constant 0 : index
    %99 = vector.load %arg4[%c0_82, %c0_83] : memref<1x128xf32, #tpu.memory_space<vmem>>, vector<1x128xf32>
    %100 = vector.broadcast %99 : vector<1x128xf32> to vector<8x128xf32>
    %101 = arith.addf %98, %100 : vector<8x128xf32>
    %cst_84 = arith.constant dense<0xFF800000> : vector<8xf32>
    %102 = vector.multi_reduction <maximumf>, %101, %cst_84 [1] : vector<8x128xf32> to vector<8xf32>
    %103 = vector.shape_cast %102 : vector<8xf32> to vector<8x1xf32>
    %104 = vector.broadcast %103 : vector<8x1xf32> to vector<8x128xf32>
    %105 = arith.subf %101, %104 : vector<8x128xf32>
    %106 = math.exp %105 : vector<8x128xf32>
    %cst_85 = arith.constant dense<0.000000e+00> : vector<8xf32>
    %107 = vector.multi_reduction <add>, %106, %cst_85 [1] : vector<8x128xf32> to vector<8xf32>
    %108 = vector.shape_cast %107 : vector<8xf32> to vector<8x1xf32>
    %109 = math.log %108 : vector<8x1xf32>
    %110 = vector.broadcast %109 : vector<8x1xf32> to vector<8x128xf32>
    %111 = arith.subf %105, %110 : vector<8x128xf32>
    %c0_86 = arith.constant 0 : index
    %c0_87 = arith.constant 0 : index
    %112 = vector.load %arg5[%c0_86, %c0_87] : memref<8x128xf32, #tpu.memory_space<vmem>>, vector<8x128xf32>
    tpu.vector_store %arg5[%c0_86, %c0_87], %111 {strides = array<i32>} : memref<8x128xf32, #tpu.memory_space<vmem>>, vector<8x128xf32>,
    return
  }
  func.func @transform_1(%arg0: i32, %arg1: memref<16xi32, #tpu.memory_space<smem>>) -> (i32, i32) {
    %c0_i32 = arith.constant 0 : i32
    %c0_i32_0 = arith.constant 0 : i32
    %c0_i32_1 = arith.constant 0 : i32
    return %c0_i32, %c0_i32_0 : i32, i32
  }
  func.func @transform_2(%arg0: i32, %arg1: memref<16xi32, #tpu.memory_space<smem>>) -> (i32, i32) {
    %c0_i32 = arith.constant 0 : i32
    %c0_i32_0 = arith.constant 0 : i32
    %c0_i32_1 = arith.constant 0 : i32
    return %c0_i32, %c0_i32_0 : i32, i32
  }
  func.func @transform_3(%arg0: i32, %arg1: memref<16xi32, #tpu.memory_space<smem>>) -> (i32, i32) {
    %c0_i32 = arith.constant 0 : i32
    %c0_i32_0 = arith.constant 0 : i32
    return %arg0, %c0_i32 : i32, i32
  }
}

</mosaic_0001>

<llo_original>
// kernel: tpu_custom_call.1
$region0: #{tpu_custom_call.1}
  #allocation0 [shape = 'u32[]', space=smem, size = 0x4, offset = 0x4, fixed_abs, tag = 'smem constant byte address 0x4 - core index']
  #allocation1 [shape = 'u32[144,128]{1,0:T(1,128)}', space=vmem, size = 0x12000, scoped, tag = 'internal scratch']
  #allocation2 [shape = 'f32[8,128]{1,0:T(8,128)}', space=vmem, size = 0x1000, scoped, tag = 'scratch operand']
  #allocation3 [shape = 's32[8]{0}', space=sflag, size = 0x20, scoped, tag = 'scratch operand']
  #allocation4 [shape = 's32[1]{0}', space=sflag, size = 0x4, scoped, tag = 'scoped memory for tpu_custom_call.1']
  #allocation5 [shape = 'u8[512]{0}', space=smem, size = 0x200, scoped, tag = 'prefetched SMEM operand 0']
  #allocation10 [shape = 's32[]', space=sflag, size = 0x4, offset = 0, fixed_abs, tag = 'sflag constant byte address 0x0 - dummy sync flag']
  #allocation11 [shape = 's32[]', space=sflag, size = 0x4, offset = 0, fixed_abs, tag = 'sflag constant byte address 0x0 - dummy sync flag']
  #allocation12 [shape = 'u32[]', space=smem, size = 0x4, offset = 0x44, fixed_abs, tag = 'smem constant byte address 0x44 - assertion arg 0']
  #allocation13 [shape = 'u32[]', space=smem, size = 0x4, offset = 0x48, fixed_abs, tag = 'smem constant byte address 0x48 - assertion arg 1']
  #allocation14 [shape = 's32[]', space=sflag, size = 0x4, offset = 0, fixed_abs, tag = 'sflag constant byte address 0x0 - dummy sync flag']
  #allocation15 [shape = 's32[]', space=sflag, size = 0x4, offset = 0, fixed_abs, tag = 'sflag constant byte address 0x0 - dummy sync flag']
  #allocation16 [shape = 's32[]', space=sflag, size = 0x4, offset = 0, fixed_abs, tag = 'sflag constant byte address 0x0 - dummy sync flag']
  #allocation17 [shape = 's32[]', space=sflag, size = 0x4, offset = 0, fixed_abs, tag = 'sflag constant byte address 0x0 - dummy sync flag']
  #allocation18 [shape = 's32[]', space=sflag, size = 0x4, offset = 0, fixed_abs, tag = 'sflag constant byte address 0x0 - dummy sync flag']
  #allocation19 [shape = 's32[]', space=sflag, size = 0x4, offset = 0, fixed_abs, tag = 'sflag constant byte address 0x0 - dummy sync flag']
  #allocation20 [shape = 's32[]', space=sflag, size = 0x4, offset = 0, fixed_abs, tag = 'sflag constant byte address 0x0 - dummy sync flag']
  #allocation21 [shape = 's32[]', space=sflag, size = 0x4, offset = 0, fixed_abs, tag = 'sflag constant byte address 0x0 - dummy sync flag']
  #allocation22 [shape = 's32[]', space=sflag, size = 0x4, offset = 0, fixed_abs, tag = 'sflag constant byte address 0x0 - dummy sync flag']
  #allocation23 [shape = 's32[]', space=sflag, size = 0x4, offset = 0, fixed_abs, tag = 'sflag constant byte address 0x0 - dummy sync flag']
  #allocation24 [shape = 's32[]', space=sflag, size = 0x4, offset = 0, fixed_abs, tag = 'sflag constant byte address 0x0 - dummy sync flag']
  #allocation25 [shape = 's32[]', space=sflag, size = 0x4, offset = 0, fixed_abs, tag = 'sflag constant byte address 0x0 - dummy sync flag']
  #allocation26 [shape = 's32[]', space=sflag, size = 0x4, offset = 0, fixed_abs, tag = 'sflag constant byte address 0x0 - dummy sync flag']
  #allocation27 [shape = 's32[]', space=sflag, size = 0x4, offset = 0, fixed_abs, tag = 'sflag constant byte address 0x0 - dummy sync flag']
  %s0 = inlined_call_operand.hbm [shape: s32[16], index: 0, kind: input, shape index: {}]
  %s1 = inlined_call_operand.hbm [shape: f32[50,128], index: 1, kind: input, shape index: {}]
  %s2 = inlined_call_operand.hbm [shape: f32[128,128], index: 2, kind: input, shape index: {}]
  %s3 = inlined_call_operand.vmem [shape: f32[1,128], index: 3, kind: input, shape index: {}]
  %s4 = inlined_call_operand.hbm [shape: f32[16,128], index: 4, kind: output, shape index: {}]
  %s5 = sld [smem:[#allocation0]]
  $region77: #{tpu_custom_call.1} parent=0
    _
  %s7 = ssub.s32 1, %s5
  %s8 = scalar_select 0, %s7, %s5
  %10 = dma.hbm_to_smem %s0, 16, [#allocation5], [#allocation4]
  %11 = dma.done [#allocation4], 16
  %12 = sfence
  $region1: #{tpu_custom_call.1} parent=0
    #allocation6 [shape = 'u8[65536]{0}', space=vmem, size = 0x10000, scoped, tag = 'input window, operand 2, single buffered']
    #allocation7 [shape = 's32[2]{0}', space=sflag, size = 0x8, scoped, tag = 'scoped memory for tpu_custom_call.1']
    #allocation8 [shape = 's32[2]{0}', space=sflag, size = 0x8, scoped, tag = 'scoped memory for tpu_custom_call.1']
    #allocation9 [shape = 'u8[8192]{0}', space=vmem, size = 0x2000, scoped, tag = 'output window, operand 0']
    %13 = vsyncpa [#allocation7], 0
    %14 = vsyncpa [#allocation8], 0
    %s15 = scalar_lea.sflag [#allocation8], 1
    %16 = vsyncpa %s15, 0
    loop: start=0, step=1, limit=4
    $region2: #{tpu_custom_call.1} parent=1 // loop_pre_header
      _
    $region3: #{tpu_custom_call.1} parent=1 // loop_header
      %s18 = sphi 0, %s22
      %p19 = scmp.ge.s32.totalorder %s18, 4
      %s26 = sphi 0, %s26
      %s28 = sphi 0, %s26
      %s29 = sphi 0, %s28
      %s43 = sphi 0, %s29
      %s47 = sphi 0, %s47
      %s49 = sphi 0, %s47
      %s50 = sphi 0, %s49
      %s64 = sphi 0, %s50
      %s70 = sphi 0, %s72
      %s73 = sphi 0, %s70
      %s74 = sphi 0, %s73
      %s90 = sphi 0, %s74
    $region4: #{tpu_custom_call.1} parent=1 // loop_header_branch
      %21 = sbr.rel (%p19) target = $region8
    $region5: #{tpu_custom_call.1} parent=1 // loop_body
      %s23 = ssub.s32 %s18, 1
      %s24 = ssub.s32 %s18, 2
      %s25 = sadd.s32 %s18, 1
      %s27 = sadd.s32 %s26, 1
      %p30 = scmp.eq.s32.totalorder %s18, 1
      %p31 = scmp.ne.s32.totalorder %s26, %s28
      %p32 = scmp.eq.s32.totalorder %s18, 0
      %p33 = por %p31, %p32
      %p34 = scmp.ne.s32.totalorder %s26, %s28
      %p35 = scmp.eq.s32.totalorder %s23, 1
      %p36 = por %p34, %p35
      %p37 = scmp.ne.s32.totalorder %s28, %s29
      %p38 = scmp.eq.s32.totalorder %s23, 0
      %p39 = por %p37, %p38
      %p40 = scmp.ne.s32.totalorder %s28, %s29
      %p41 = scmp.eq.s32.totalorder %s24, 1
      %p42 = por %p40, %p41
      %p44 = scmp.ne.s32.totalorder %s29, %s43
      %p45 = scmp.eq.s32.totalorder %s24, 0
      %p46 = por %p44, %p45
      %s48 = sadd.s32 %s47, 1
      %p51 = scmp.eq.s32.totalorder %s18, 1
      %p52 = scmp.ne.s32.totalorder %s47, %s49
      %p53 = scmp.eq.s32.totalorder %s18, 0
      %p54 = por %p52, %p53
      %p55 = scmp.ne.s32.totalorder %s47, %s49
      %p56 = scmp.eq.s32.totalorder %s23, 1
      %p57 = por %p55, %p56
      %p58 = scmp.ne.s32.totalorder %s49, %s50
      %p59 = scmp.eq.s32.totalorder %s23, 0
      %p60 = por %p58, %p59
      %p61 = scmp.ne.s32.totalorder %s49, %s50
      %p62 = scmp.eq.s32.totalorder %s24, 1
      %p63 = por %p61, %p62
      %p65 = scmp.ne.s32.totalorder %s50, %s64
      %p66 = scmp.eq.s32.totalorder %s24, 0
      %p67 = por %p65, %p66
      %s68 = ssub.s32 %s18, %s25
      %p69 = scmp.eq.s32.totalorder %s68, 0
      %s71 = sadd.s32 %s70, 1
      %s72 = scalar_select %p69, %s70, %s71
      %p75 = pneg %p69
      %p76 = scmp.eq.s32.totalorder %s18, 1
      %p77 = por %p75, %p76
      %p78 = scmp.ne.s32.totalorder %s70, %s73
      %p79 = scmp.eq.s32.totalorder %s18, 0
      %p80 = por %p78, %p79
      %p81 = scmp.ne.s32.totalorder %s70, %s73
      %p82 = scmp.eq.s32.totalorder %s23, 1
      %p83 = por %p81, %p82
      %p84 = scmp.ne.s32.totalorder %s73, %s74
      %p85 = scmp.eq.s32.totalorder %s23, 0
      %p86 = por %p84, %p85
      %p87 = scmp.ne.s32.totalorder %s73, %s74
      %p88 = scmp.eq.s32.totalorder %s24, 1
      %p89 = por %p87, %p88
      %p91 = scmp.ne.s32.totalorder %s74, %s90
      %p92 = scmp.eq.s32.totalorder %s24, 0
      %p93 = por %p91, %p92
      %p94 = scmp.le.s32.totalorder 1, %s18
      %p95 = scmp.lt.s32.totalorder %s18, 3
      %p96 = pnand %p94, %p95
      %p97 = pneg %p96
      // Predicated region
      $region9: #{tpu_custom_call.1} parent=5 // pred_check
        _
      $region10: #{tpu_custom_call.1} parent=5 // pred_check_branch
        %99 = sbr.rel (%p96) target = $region12
      $region11: #{tpu_custom_call.1} parent=5 // pred_region
        %s100 = ssub.s32 %s18, 1
        // Predicated region
        $region13: #{tpu_custom_call.1} parent=11 // pred_check
          %p101 = pneg %p39
        $region14: #{tpu_custom_call.1} parent=11 // pred_check_branch
          %103 = sbr.rel (%p101) target = $region16
        $region15: #{tpu_custom_call.1} parent=11 // pred_region
          %s105 = ssub.s32 2048, 2048
          %106 = vsyncadd [#allocation7], %s105
          %s107 = sshll.u32 [#allocation6], 4
          %s108 = int_to_ptr.vmem [resolvable:$true] %s107
          %113 = dma.hbm_to_vmem [thread:$0]  %s2, 2048, %s108, [#allocation7], 128, 128, 8
        $region16: #{tpu_custom_call.1} parent=11 // pred_fallthru
          _
        // Predicated region
        $region17: #{tpu_custom_call.1} parent=11 // pred_check
          %p114 = pneg %p60
        $region18: #{tpu_custom_call.1} parent=11 // pred_check_branch
          %116 = sbr.rel (%p114) target = $region20
        $region19: #{tpu_custom_call.1} parent=11 // pred_region
          _
        $region20: #{tpu_custom_call.1} parent=11 // pred_fallthru
          _
      $region12: #{tpu_custom_call.1} parent=5 // pred_fallthru
        _
      %p117 = scmp.lt.s32.totalorder %s18, 2
      // Predicated region
      $region21: #{tpu_custom_call.1} parent=5 // pred_check
        %p118 = pneg %p117
      $region22: #{tpu_custom_call.1} parent=5 // pred_check_branch
        %120 = sbr.rel (%p118) target = $region24
      $region23: #{tpu_custom_call.1} parent=5 // pred_region
        _
      $region24: #{tpu_custom_call.1} parent=5 // pred_fallthru
        _
      %p121 = scmp.le.s32.totalorder 1, %s18
      %p122 = scmp.lt.s32.totalorder %s18, 3
      %p123 = pnand %p121, %p122
      %p124 = pneg %p123
      // Predicated region
      $region25: #{tpu_custom_call.1} parent=5 // pred_check
        _
      $region26: #{tpu_custom_call.1} parent=5 // pred_check_branch
        %126 = sbr.rel (%p123) target = $region28
      $region27: #{tpu_custom_call.1} parent=5 // pred_region
        %s127 = ssub.s32 %s18, 1
        // Predicated region
        $region29: #{tpu_custom_call.1} parent=27 // pred_check
          %p128 = pneg %p39
        $region30: #{tpu_custom_call.1} parent=27 // pred_check_branch
          %130 = sbr.rel (%p128) target = $region32
        $region31: #{tpu_custom_call.1} parent=27 // pred_region
          %131 = dma.done [#allocation7], 2048
        $region32: #{tpu_custom_call.1} parent=27 // pred_fallthru
          _
        %p132 = pneg %p39
        %p133 = pneg %p36
        %p134 = pneg %p60
        %p135 = pneg %p57
        %p136 = pneg %p86
        %p137 = pneg %p83
        %s138 = sand.u32 %s73, 1
        %s139 = scalar_lea.sflag [#allocation8], %s138
        %s140 = sand.u32 %s73, 1
        %s141 = smul.addr %s140, 8
        %s142 = scalar_lea.vmem [#allocation9], %s141
        %s143 = smul.u32 %s23, 8
        %s144 = sld [smem:[#allocation5 + %s143]]
        %s145 = smul.addr %s144, 16
        %s146 = scalar_lea.hbm %s1, %s145
        // Predicated region
        $region33: #{tpu_custom_call.1} parent=27 // pred_check
          _
        $region34: #{tpu_custom_call.1} parent=27 // pred_check_branch
          %148 = sbr.rel target = $region36
        $region35: #{tpu_custom_call.1} parent=27 // pred_region
          %149 = sst [smem:[#allocation12]] [#allocation11]
          %150 = sst [smem:[#allocation13]] [#allocation10]
        $region36: #{tpu_custom_call.1} parent=27 // pred_fallthru
          _
        %152 = shalt.err (0)
        %s154 = sshll.u32 [#allocation2], 4
        %s155 = int_to_ptr.vmem [resolvable:$true] %s154
        %157 = dma.hbm_to_vmem [thread:$0]  %s146, 16, %s155, [#allocation3]
        %s158 = sadd.s32 %s143, 1
        %s159 = sld [smem:[#allocation5 + %s158]]
        %s160 = smul.addr %s159, 16
        %s161 = scalar_lea.hbm %s1, %s160
        %s162 = scalar_lea.vmem [#allocation2], 1
        %s163 = scalar_lea.sflag [#allocation3], 1
        // Predicated region
        $region37: #{tpu_custom_call.1} parent=27 // pred_check
          _
        $region38: #{tpu_custom_call.1} parent=27 // pred_check_branch
          %165 = sbr.rel target = $region40
        $region39: #{tpu_custom_call.1} parent=27 // pred_region
          %166 = sst [smem:[#allocation12]] [#allocation15]
          %167 = sst [smem:[#allocation13]] [#allocation14]
        $region40: #{tpu_custom_call.1} parent=27 // pred_fallthru
          _
        %169 = shalt.err (0)
        %s171 = sshll.u32 %s162, 4
        %s172 = int_to_ptr.vmem [resolvable:$true] %s171
        %174 = dma.hbm_to_vmem [thread:$0]  %s161, 16, %s172, %s163
        %s175 = sadd.s32 %s143, 2
        %s176 = sld [smem:[#allocation5 + %s175]]
        %s177 = smul.addr %s176, 16
        %s178 = scalar_lea.hbm %s1, %s177
        %s179 = scalar_lea.vmem [#allocation2], 2
        %s180 = scalar_lea.sflag [#allocation3], 2
        // Predicated region
        $region41: #{tpu_custom_call.1} parent=27 // pred_check
          _
        $region42: #{tpu_custom_call.1} parent=27 // pred_check_branch
          %182 = sbr.rel target = $region44
        $region43: #{tpu_custom_call.1} parent=27 // pred_region
          %183 = sst [smem:[#allocation12]] [#allocation17]
          %184 = sst [smem:[#allocation13]] [#allocation16]
        $region44: #{tpu_custom_call.1} parent=27 // pred_fallthru
          _
        %186 = shalt.err (0)
        %s188 = sshll.u32 %s179, 4
        %s189 = int_to_ptr.vmem [resolvable:$true] %s188
        %191 = dma.hbm_to_vmem [thread:$0]  %s178, 16, %s189, %s180
        %s192 = sadd.s32 %s143, 3
        %s193 = sld [smem:[#allocation5 + %s192]]
        %s194 = smul.addr %s193, 16
        %s195 = scalar_lea.hbm %s1, %s194
        %s196 = scalar_lea.vmem [#allocation2], 3
        %s197 = scalar_lea.sflag [#allocation3], 3
        // Predicated region
        $region45: #{tpu_custom_call.1} parent=27 // pred_check
          _
        $region46: #{tpu_custom_call.1} parent=27 // pred_check_branch
          %199 = sbr.rel target = $region48
        $region47: #{tpu_custom_call.1} parent=27 // pred_region
          %200 = sst [smem:[#allocation12]] [#allocation19]
          %201 = sst [smem:[#allocation13]] [#allocation18]
        $region48: #{tpu_custom_call.1} parent=27 // pred_fallthru
          _
        %203 = shalt.err (0)
        %s205 = sshll.u32 %s196, 4
        %s206 = int_to_ptr.vmem [resolvable:$true] %s205
        %208 = dma.hbm_to_vmem [thread:$0]  %s195, 16, %s206, %s197
        %s209 = sadd.s32 %s143, 4
        %s210 = sld [smem:[#allocation5 + %s209]]
        %s211 = smul.addr %s210, 16
        %s212 = scalar_lea.hbm %s1, %s211
        %s213 = scalar_lea.vmem [#allocation2], 4
        %s214 = scalar_lea.sflag [#allocation3], 4
        // Predicated region
        $region49: #{tpu_custom_call.1} parent=27 // pred_check
          _
        $region50: #{tpu_custom_call.1} parent=27 // pred_check_branch
          %216 = sbr.rel target = $region52
        $region51: #{tpu_custom_call.1} parent=27 // pred_region
          %217 = sst [smem:[#allocation12]] [#allocation21]
          %218 = sst [smem:[#allocation13]] [#allocation20]
        $region52: #{tpu_custom_call.1} parent=27 // pred_fallthru
          _
        %220 = shalt.err (0)
        %s222 = sshll.u32 %s213, 4
        %s223 = int_to_ptr.vmem [resolvable:$true] %s222
        %225 = dma.hbm_to_vmem [thread:$0]  %s212, 16, %s223, %s214
        %s226 = sadd.s32 %s143, 5
        %s227 = sld [smem:[#allocation5 + %s226]]
        %s228 = smul.addr %s227, 16
        %s229 = scalar_lea.hbm %s1, %s228
        %s230 = scalar_lea.vmem [#allocation2], 5
        %s231 = scalar_lea.sflag [#allocation3], 5
        // Predicated region
        $region53: #{tpu_custom_call.1} parent=27 // pred_check
          _
        $region54: #{tpu_custom_call.1} parent=27 // pred_check_branch
          %233 = sbr.rel target = $region56
        $region55: #{tpu_custom_call.1} parent=27 // pred_region
          %234 = sst [smem:[#allocation12]] [#allocation23]
          %235 = sst [smem:[#allocation13]] [#allocation22]
        $region56: #{tpu_custom_call.1} parent=27 // pred_fallthru
          _
        %237 = shalt.err (0)
        %s239 = sshll.u32 %s230, 4
        %s240 = int_to_ptr.vmem [resolvable:$true] %s239
        %242 = dma.hbm_to_vmem [thread:$0]  %s229, 16, %s240, %s231
        %s243 = sadd.s32 %s143, 6
        %s244 = sld [smem:[#allocation5 + %s243]]
        %s245 = smul.addr %s244, 16
        %s246 = scalar_lea.hbm %s1, %s245
        %s247 = scalar_lea.vmem [#allocation2], 6
        %s248 = scalar_lea.sflag [#allocation3], 6
        // Predicated region
        $region57: #{tpu_custom_call.1} parent=27 // pred_check
          _
        $region58: #{tpu_custom_call.1} parent=27 // pred_check_branch
          %250 = sbr.rel target = $region60
        $region59: #{tpu_custom_call.1} parent=27 // pred_region
          %251 = sst [smem:[#allocation12]] [#allocation25]
          %252 = sst [smem:[#allocation13]] [#allocation24]
        $region60: #{tpu_custom_call.1} parent=27 // pred_fallthru
          _
        %254 = shalt.err (0)
        %s256 = sshll.u32 %s247, 4
        %s257 = int_to_ptr.vmem [resolvable:$true] %s256
        %259 = dma.hbm_to_vmem [thread:$0]  %s246, 16, %s257, %s248
        %s260 = sadd.s32 %s143, 7
        %s261 = sld [smem:[#allocation5 + %s260]]
        %s262 = smul.addr %s261, 16
        %s263 = scalar_lea.hbm %s1, %s262
        %s264 = scalar_lea.vmem [#allocation2], 7
        %s265 = scalar_lea.sflag [#allocation3], 7
        // Predicated region
        $region61: #{tpu_custom_call.1} parent=27 // pred_check
          _
        $region62: #{tpu_custom_call.1} parent=27 // pred_check_branch
          %267 = sbr.rel target = $region64
        $region63: #{tpu_custom_call.1} parent=27 // pred_region
          %268 = sst [smem:[#allocation12]] [#allocation27]
          %269 = sst [smem:[#allocation13]] [#allocation26]
        $region64: #{tpu_custom_call.1} parent=27 // pred_fallthru
          _
        %271 = shalt.err (0)
        %s273 = sshll.u32 %s264, 4
        %s274 = int_to_ptr.vmem [resolvable:$true] %s273
        %276 = dma.hbm_to_vmem [thread:$0]  %s263, 16, %s274, %s265
        %s277 = smul.u32 1, 1
        %s278 = sshll.u32 %s277, 4
        %279 = dma.done [#allocation3], %s278
        %s280 = sshll.u32 %s277, 4
        %281 = dma.done %s163, %s280
        %s282 = sshll.u32 %s277, 4
        %283 = dma.done %s180, %s282
        %s284 = sshll.u32 %s277, 4
        %285 = dma.done %s197, %s284
        %s286 = sshll.u32 %s277, 4
        %287 = dma.done %s214, %s286
        %s288 = sshll.u32 %s277, 4
        %289 = dma.done %s231, %s288
        %s290 = sshll.u32 %s277, 4
        %291 = dma.done %s248, %s290
        %s292 = sshll.u32 %s277, 4
        %293 = dma.done %s265, %s292
        %v294 = vld [vmem:[#allocation2] sm:$0xff]
        %v295 = vld [vmem:[#allocation6] sm:$0xff]
        %v296 = vld [vmem:[#allocation6 + $0x8] sm:$0xff]
        %v297 = vld [vmem:[#allocation6 + $0x10] sm:$0xff]
        %v298 = vld [vmem:[#allocation6 + $0x18] sm:$0xff]
        %v299 = vld [vmem:[#allocation6 + $0x20] sm:$0xff]
        %v300 = vld [vmem:[#allocation6 + $0x28] sm:$0xff]
        %v301 = vld [vmem:[#allocation6 + $0x30] sm:$0xff]
        %v302 = vld [vmem:[#allocation6 + $0x38] sm:$0xff]
        %v303 = vld [vmem:[#allocation6 + $0x40] sm:$0xff]
        %v304 = vld [vmem:[#allocation6 + $0x48] sm:$0xff]
        %v305 = vld [vmem:[#allocation6 + $0x50] sm:$0xff]
        %v306 = vld [vmem:[#allocation6 + $0x58] sm:$0xff]
        %v307 = vld [vmem:[#allocation6 + $0x60] sm:$0xff]
        %v308 = vld [vmem:[#allocation6 + $0x68] sm:$0xff]
        %v309 = vld [vmem:[#allocation6 + $0x70] sm:$0xff]
        %v310 = vld [vmem:[#allocation6 + $0x78] sm:$0xff]
        %v311 = vld [vmem:[%s3] sm:$0x1]
        %v313 = vlaneseq
        %v314 = vshrl.u32 %v313, 7
        %v315 = vsub.s32 0, %v314
        %v316 = vrot.slane %v311, %v315
        %318 = vmatprep.subr.mxu0 0.0
        %319 = vmatpush1.msra.mxu0 %v310
        %320 = vmatprep.subr.mxu0 0.0
        %321 = vmatpush1.msra.mxu0 %v309
        %322 = vmatprep.subr.mxu0 0.0
        %323 = vmatpush1.msra.mxu0 %v308
        %324 = vmatprep.subr.mxu0 0.0
        %325 = vmatpush1.msra.mxu0 %v307
        %326 = vmatprep.subr.mxu0 0.0
        %327 = vmatpush1.msra.mxu0 %v306
        %328 = vmatprep.subr.mxu0 0.0
        %329 = vmatpush1.msra.mxu0 %v305
        %330 = vmatprep.subr.mxu0 0.0
        %331 = vmatpush1.msra.mxu0 %v304
        %332 = vmatprep.subr.mxu0 0.0
        %333 = vmatpush1.msra.mxu0 %v303
        %334 = vmatprep.subr.mxu0 0.0
        %335 = vmatpush1.msra.mxu0 %v302
        %336 = vmatprep.subr.mxu0 0.0
        %337 = vmatpush1.msra.mxu0 %v301
        %338 = vmatprep.subr.mxu0 0.0
        %339 = vmatpush1.msra.mxu0 %v300
        %340 = vmatprep.subr.mxu0 0.0
        %341 = vmatpush1.msra.mxu0 %v299
        %342 = vmatprep.subr.mxu0 0.0
        %343 = vmatpush1.msra.mxu0 %v298
        %344 = vmatprep.subr.mxu0 0.0
        %345 = vmatpush1.msra.mxu0 %v297
        %346 = vmatprep.subr.mxu0 0.0
        %347 = vmatpush1.msra.mxu0 %v296
        %348 = vmatprep.subr.mxu0 0.0
        %349 = vmatpush1.msra.mxu0 %v295
        %350 = vmatprep.subr.mxu0 0.0
        %351 = vmatpush2.msra.mxu0 0.0
        %352 = vmatprep.subr.mxu0 0.0
        %353 = vmatpush2.msra.mxu0 0.0
        %354 = vmatprep.subr.mxu0 0.0
        %355 = vmatpush2.msra.mxu0 0.0
        %356 = vmatprep.subr.mxu0 0.0
        %357 = vmatpush2.msra.mxu0 0.0
        %358 = vmatprep.subr.mxu0 0.0
        %359 = vmatpush2.msra.mxu0 0.0
        %360 = vmatprep.subr.mxu0 0.0
        %361 = vmatpush2.msra.mxu0 0.0
        %362 = vmatprep.subr.mxu0 0.0
        %363 = vmatpush2.msra.mxu0 0.0
        %364 = vmatprep.subr.mxu0 0.0
        %365 = vmatpush2.msra.mxu0 0.0
        %366 = vmatprep.subr.mxu0 0.0
        %367 = vmatpush2.msra.mxu0 0.0
        %368 = vmatprep.subr.mxu0 0.0
        %369 = vmatpush2.msra.mxu0 0.0
        %370 = vmatprep.subr.mxu0 0.0
        %371 = vmatpush2.msra.mxu0 0.0
        %372 = vmatprep.subr.mxu0 0.0
        %373 = vmatpush2.msra.mxu0 0.0
        %374 = vmatprep.subr.mxu0 0.0
        %375 = vmatpush2.msra.mxu0 0.0
        %376 = vmatprep.subr.mxu0 0.0
        %377 = vmatpush2.msra.mxu0 0.0
        %378 = vmatprep.subr.mxu0 0.0
        %379 = vmatpush2.msra.mxu0 0.0
        %380 = vmatprep.subr.mxu0 0.0
        %381 = vmatpush2.msra.mxu0 0.0
        %382 = vmatprep.mubr.f32.mxu0 0.0
        %383 = vmatmul.mubr.f32.gmra.mxu0 %v294
        %v384 = vpop.f32.mrf.mxu0
        %v385 = vadd.f32 %v316, %v384
        %v386 = vpop.f32.mrf.mxu0
        %387 = vdwg.mxu0
        %388 = vmax.xlane.f32.xlu0 %v385
        %v389 = vpop.xlane.xlu0 %388
        %v390 = vsub.f32 %v385, %v389
        %v391 = vmul.f32 %v390, 1.442695
        %v392 = vpow.pop %v391
        %393 = vadd.xlane.f32.xlu0 %v392
        %v394 = vpop.xlane.xlu0 %393
        %v395 = vlog2.pop %v394
        %v396 = vmul.f32 %v395, 0.6931472
        %v397 = vsub.f32 %v390, %v396
        %398 = vst [vmem:[%s142] sm:$0xff] %v397
        %s399 = sand.u32 %s73, 1
        %s400 = scalar_lea.sflag [#allocation8], %s399
        %s401 = sand.u32 %s73, 1
        %s402 = smul.addr %s401, 8
        %s403 = scalar_lea.vmem [#allocation9], %s402
        // Predicated region
        $region65: #{tpu_custom_call.1} parent=27 // pred_check
          %p404 = pneg %p83
        $region66: #{tpu_custom_call.1} parent=27 // pred_check_branch
          %406 = sbr.rel (%p404) target = $region68
        $region67: #{tpu_custom_call.1} parent=27 // pred_region
          %s408 = ssub.s32 128, 128
          %409 = vsyncadd %s400, %s408
          %s410 = smul.addr %s23, 128
          %s411 = scalar_lea.hbm %s4, %s410
          %s413 = sshll.u32 %s403, 4
          %s414 = int_to_ptr.vmem [resolvable:$true] %s413
          %416 = dma.vmem_to_hbm [thread:$0]  %s414, 128, %s411, %s400
        $region68: #{tpu_custom_call.1} parent=27 // pred_fallthru
          _
      $region28: #{tpu_custom_call.1} parent=5 // pred_fallthru
        _
      %p417 = scmp.le.s32.totalorder 2, %s18
      // Predicated region
      $region69: #{tpu_custom_call.1} parent=5 // pred_check
        %p418 = pneg %p417
      $region70: #{tpu_custom_call.1} parent=5 // pred_check_branch
        %420 = sbr.rel (%p418) target = $region72
      $region71: #{tpu_custom_call.1} parent=5 // pred_region
        %s421 = ssub.s32 %s18, 2
        // Predicated region
        $region73: #{tpu_custom_call.1} parent=71 // pred_check
          %p422 = pneg %p89
        $region74: #{tpu_custom_call.1} parent=71 // pred_check_branch
          %424 = sbr.rel (%p422) target = $region76
        $region75: #{tpu_custom_call.1} parent=71 // pred_region
          %s425 = sand.u32 %s74, 1
          %s426 = scalar_lea.sflag [#allocation8], %s425
          %s427 = sand.u32 %s74, 1
          %s428 = smul.addr %s427, 8
          %s429 = scalar_lea.vmem [#allocation9], %s428
          %430 = dma.done %s426, 128
        $region76: #{tpu_custom_call.1} parent=71 // pred_fallthru
          _
      $region72: #{tpu_custom_call.1} parent=5 // pred_fallthru
        _
    $region6: #{tpu_custom_call.1} parent=1 // loop_footer
      %s22 = sadd.s32 1, %s18
    $region7: #{tpu_custom_call.1} parent=1 // loop_footer_branch
      %17 = sbr.rel target = $region3
    $region8: #{tpu_custom_call.1} parent=1 // loop_exit
      _
    %431 = vsyncpa [#allocation7], 1
    %s432 = scalar_lea.sflag [#allocation7], 1
    %433 = vsyncpa %s432, 1
    %434 = vsyncpa [#allocation8], 1
    %s435 = scalar_lea.sflag [#allocation8], 1
    %436 = vsyncpa %s435, 1
  %437 = vsyncmov [#allocation3]
  %s438 = vpop.sfrf %437
  %p439 = scmp.eq.s32.totalorder %s438, 0
  %p440 = pneg %p439
  %442 = shalt.err (%p440)
  %s443 = scalar_lea.sflag [#allocation3], 1
  %444 = vsyncmov %s443
  %s445 = vpop.sfrf %444
  %p446 = scmp.eq.s32.totalorder %s445, 0
  %p447 = pneg %p446
  %449 = shalt.err (%p447)
  %s450 = scalar_lea.sflag [#allocation3], 2
  %451 = vsyncmov %s450
  %s452 = vpop.sfrf %451
  %p453 = scmp.eq.s32.totalorder %s452, 0
  %p454 = pneg %p453
  %456 = shalt.err (%p454)
  %s457 = scalar_lea.sflag [#allocation3], 3
  %458 = vsyncmov %s457
  %s459 = vpop.sfrf %458
  %p460 = scmp.eq.s32.totalorder %s459, 0
  %p461 = pneg %p460
  %463 = shalt.err (%p461)
  %s464 = scalar_lea.sflag [#allocation3], 4
  %465 = vsyncmov %s464
  %s466 = vpop.sfrf %465
  %p467 = scmp.eq.s32.totalorder %s466, 0
  %p468 = pneg %p467
  %470 = shalt.err (%p468)
  %s471 = scalar_lea.sflag [#allocation3], 5
  %472 = vsyncmov %s471
  %s473 = vpop.sfrf %472
  %p474 = scmp.eq.s32.totalorder %s473, 0
  %p475 = pneg %p474
  %477 = shalt.err (%p475)
  %s478 = scalar_lea.sflag [#allocation3], 6
  %479 = vsyncmov %s478
  %s480 = vpop.sfrf %479
  %p481 = scmp.eq.s32.totalorder %s480, 0
  %p482 = pneg %p481
  %484 = shalt.err (%p482)
  %s485 = scalar_lea.sflag [#allocation3], 7
  %486 = vsyncmov %s485
  %s487 = vpop.sfrf %486
  %p488 = scmp.eq.s32.totalorder %s487, 0
  %p489 = pneg %p488
  %491 = shalt.err (%p489)

</llo_original>
